<compile_context>
chip_gen: v6e
topology: v6e:2x2x1
jax: 0.10.0
libtpu: 0.0.40
codegen_flags: <defaults>
</compile_context>

<pallas_src>
import functools

import jax
import jax.numpy as jnp
from jax.experimental import pallas as pl
from jax.experimental.pallas import tpu as pltpu

EPS = 1e-12


def _round_up(x, m):
    return (x + m - 1) // m * m


def bert_self_output_kernel(h_ref, x_ref, w_ref, b_ref, g_ref, beta_ref, o_ref,
                            *, inv_h):
    # Dense on the MXU: bf16 x bf16 -> f32 accumulate. The activation tile is
    # cast on the VPU (free vs. the matmul); the weight arrives pre-cast.
    y = jnp.dot(h_ref[...].astype(w_ref.dtype), w_ref[...],
                preferred_element_type=jnp.float32)
    y = y + b_ref[...]                        # bias, broadcast over rows (f32)
    # Dropout: identity (eval mode).
    y = y + x_ref[...].astype(jnp.float32)    # residual add in f32

    # LayerNorm over the lane (last) axis. Single stats pass: lane-reduce sum
    # and sum-of-squares, scale by the compile-time constant 1/H.
    s1 = jnp.sum(y, axis=-1, keepdims=True)
    s2 = jnp.sum(y * y, axis=-1, keepdims=True)
    mean = s1 * inv_h
    var = jnp.maximum(s2 * inv_h - mean * mean, 0.0)
    norm = (y - mean) * jax.lax.rsqrt(var + EPS)
    o_ref[...] = (norm * g_ref[...] + beta_ref[...]).astype(o_ref.dtype)


def prepare_self_output_params(weight, bias, gamma, beta,
                               matmul_dtype=jnp.bfloat16):
    """One-time parameter prep (do NOT repeat per call):
    weight: [H_out, H_in] (PyTorch nn.Linear layout) -> [H_in, H_out] in bf16.
    bias/gamma/beta -> [1, H] f32 rows for lane-broadcast inside the kernel."""
    w_t = jnp.asarray(weight).T.astype(matmul_dtype)
    b2 = jnp.asarray(bias, jnp.float32).reshape(1, -1)
    g2 = jnp.asarray(gamma, jnp.float32).reshape(1, -1)
    beta2 = jnp.asarray(beta, jnp.float32).reshape(1, -1)
    return w_t, b2, g2, beta2


@functools.partial(jax.jit, static_argnames=("row_tile",))
def bert_self_output(hidden_states, input_tensor, w_t, bias2, gamma2, beta2,
                     *, row_tile=256):
    """hidden_states, input_tensor: [B, S, H]; w_t: [H_in, H_out] (bf16);
    bias2/gamma2/beta2: [1, H] (from prepare_self_output_params)."""
    B, S, H = hidden_states.shape
    rows = B * S

    h2 = hidden_states.reshape(rows, H)
    x2 = input_tensor.reshape(rows, H)

    # Row tile: fill the MXU M dim (256) but never exceed the problem; keep a
    # multiple of 8 (sublane). If that would leave a single grid step, split in
    # two so both v7x TensorCores get a tile.
    tile = min(row_tile, _round_up(rows, 8))
    if _round_up(rows, tile) // tile < 2 and tile >= 256:
        tile = _round_up((rows + 1) // 2, 8)
    padded = _round_up(rows, tile)
    if padded != rows:
        pad = padded - rows
        h2 = jnp.pad(h2, ((0, pad), (0, 0)))
        x2 = jnp.pad(x2, ((0, pad), (0, 0)))
    grid = (padded // tile,)

    kernel = functools.partial(bert_self_output_kernel, inv_h=1.0 / H)

    out = pl.pallas_call(
        kernel,
        out_shape=jax.ShapeDtypeStruct((padded, H), hidden_states.dtype),
        grid_spec=pltpu.PrefetchScalarGridSpec(
            num_scalar_prefetch=0,
            grid=grid,
            in_specs=[
                pl.BlockSpec((tile, H), lambda i: (i, 0)),   # hidden_states rows
                pl.BlockSpec((tile, H), lambda i: (i, 0)),   # residual rows
                # Grid-invariant operands: constant index_map => DMA'd once,
                # stays resident in VMEM across all grid steps.
                pl.BlockSpec((H, H), lambda i: (0, 0)),      # weight [in,out] bf16
                pl.BlockSpec((1, H), lambda i: (0, 0)),      # bias
                pl.BlockSpec((1, H), lambda i: (0, 0)),      # gamma
                pl.BlockSpec((1, H), lambda i: (0, 0)),      # beta
            ],
            out_specs=pl.BlockSpec((tile, H), lambda i: (i, 0)),
        ),
        compiler_params=pltpu.CompilerParams(
            dimension_semantics=("parallel",),
            vmem_limit_bytes=48 * 1024 * 1024,   # explicit budget; safe on v7x (64 MiB)
        ),
    )(h2, x2, w_t, bias2, gamma2, beta2)

    if padded != rows:
        out = out[:rows]
    return out.reshape(B, S, H)


# ---------------- references ----------------

def reference_f32(hidden_states, input_tensor, weight, bias, gamma, beta):
    """PyTorch-semantics reference, all f32 (weight in [out, in] layout)."""
    y = jnp.einsum("bsh,oh->bso", hidden_states, weight) + bias
    y = y + input_tensor
    mean = jnp.mean(y, axis=-1, keepdims=True)
    var = jnp.mean((y - mean) ** 2, axis=-1, keepdims=True)
    return (y - mean) * jax.lax.rsqrt(var + EPS) * gamma + beta


def reference_mirror(hidden_states, input_tensor, w_t, bias2, gamma2, beta2):
    """Mirrors the kernel math exactly (bf16 matmul operands, f32 accumulate,
    sum / sum-of-squares LayerNorm) for a tight numerical check."""
    B, S, H = hidden_states.shape
    y = jnp.dot(hidden_states.reshape(-1, H).astype(w_t.dtype), w_t,
                preferred_element_type=jnp.float32).reshape(B, S, H)
    y = y + bias2 + input_tensor
    s1 = jnp.sum(y, axis=-1, keepdims=True)
    s2 = jnp.sum(y * y, axis=-1, keepdims=True)
    mean = s1 / H
    var = jnp.maximum(s2 / H - mean * mean, 0.0)
    return (y - mean) * jax.lax.rsqrt(var + EPS) * gamma2 + beta2


if __name__ == "__main__":
    # Small shape (module-consistent) + a lane-dense shape so the large-tile /
    # full-128-lane path is exercised too.
    for (B, S, H) in [(2, 8, 32), (4, 128, 256)]:
        key = jax.random.PRNGKey(0)
        k1, k2, k3, k4 = jax.random.split(key, 4)

        hidden_states = jax.random.normal(k1, (B, S, H), dtype=jnp.float32)
        input_tensor = jax.random.normal(k2, (B, S, H), dtype=jnp.float32)

        # Deterministic parameter init (mimics nn.Linear / nn.LayerNorm shapes).
        bound = 1.0 / (H ** 0.5)
        weight = jax.random.uniform(k3, (H, H), jnp.float32, -bound, bound)  # [out, in]
        bias = jax.random.uniform(k4, (H,), jnp.float32, -bound, bound)
        gamma = jnp.ones((H,), jnp.float32)
        beta = jnp.zeros((H,), jnp.float32)

        params = prepare_self_output_params(weight, bias, gamma, beta)

        out = bert_self_output(hidden_states, input_tensor, *params)
        out = jax.block_until_ready(out)
        assert out.shape == (B, S, H)

        # Tight check against a reference that mirrors the kernel's bf16 matmul.
        ref_m = reference_mirror(hidden_states, input_tensor, *params)
        assert jnp.allclose(out, ref_m, atol=2e-3, rtol=2e-3), \
            f"mismatch vs mirrored reference at H={H}"

        # Semantic check against the full-f32 PyTorch-style reference
        # (tolerance loosened for the bf16 matmul operands).
        ref_f = reference_f32(hidden_states, input_tensor, weight, bias, gamma, beta)
        assert jnp.allclose(out, ref_f, atol=3e-2, rtol=3e-2), \
            f"mismatch vs f32 reference at H={H}"

    print("KERNEL_OK")
</pallas_src>

<mosaic_0001>
module attributes {stable_mosaic.version = 11 : i64} {
  func.func @bert_self_output_kernel(%arg0: i32, %arg1: memref<16x32xf32, #tpu.memory_space<vmem>>, %arg2: memref<16x32xf32, #tpu.memory_space<vmem>>, %arg3: memref<32x32xbf16, #tpu.memory_space<vmem>>, %arg4: memref<1x32xf32, #tpu.memory_space<vmem>>, %arg5: memref<1x32xf32, #tpu.memory_space<vmem>>, %arg6: memref<1x32xf32, #tpu.memory_space<vmem>>, %arg7: memref<16x32xf32, #tpu.memory_space<vmem>>) attributes {dimension_semantics = [#tpu.dimension_semantics<parallel>], iteration_bounds = array<i64: 1>, scalar_prefetch = 0 : i64, scratch_operands = 0 : i64, tpu.core_type = #tpu.core_type<tc>, window_params = [{transform_indices = @transform_0, window_bounds = array<i64: 16, 32>}, {transform_indices = @transform_1, window_bounds = array<i64: 16, 32>}, {pipeline_mode = #tpu.pipeline_mode<synchronous>, transform_indices = @transform_2, window_bounds = array<i64: 32, 32>}, {pipeline_mode = #tpu.pipeline_mode<synchronous>, transform_indices = @transform_3, window_bounds = array<i64: 1, 32>}, {pipeline_mode = #tpu.pipeline_mode<synchronous>, transform_indices = @transform_4, window_bounds = array<i64: 1, 32>}, {pipeline_mode = #tpu.pipeline_mode<synchronous>, transform_indices = @transform_5, window_bounds = array<i64: 1, 32>}, {transform_indices = @transform_6, window_bounds = array<i64: 16, 32>}]} {
    %c0 = arith.constant 0 : index
    %c0_0 = arith.constant 0 : index
    %0 = vector.load %arg1[%c0, %c0_0] : memref<16x32xf32, #tpu.memory_space<vmem>>, vector<16x32xf32>
    %1 = arith.truncf %0 : vector<16x32xf32> to vector<16x32xbf16>
    %c0_1 = arith.constant 0 : index
    %c0_2 = arith.constant 0 : index
    %2 = vector.load %arg3[%c0_1, %c0_2] : memref<32x32xbf16, #tpu.memory_space<vmem>>, vector<32x32xbf16>
    %cst = arith.constant dense<0.000000e+00> : vector<16x32xf32>
    %3 = tpu.matmul %1, %2, %cst {dimension_numbers = #tpu.dot_dimension_numbers<[1], [0], [0], [1], [0, 0, 1, 1], [], []>} : vector<16x32xbf16>, vector<32x32xbf16>, vector<16x32xf32> -> vector<16x32xf32>
    %c0_3 = arith.constant 0 : index
    %c0_4 = arith.constant 0 : index
    %4 = vector.load %arg4[%c0_3, %c0_4] : memref<1x32xf32, #tpu.memory_space<vmem>>, vector<1x32xf32>
    %5 = vector.broadcast %4 : vector<1x32xf32> to vector<16x32xf32>
    %6 = arith.addf %3, %5 : vector<16x32xf32>
    %c0_5 = arith.constant 0 : index
    %c0_6 = arith.constant 0 : index
    %7 = vector.load %arg2[%c0_5, %c0_6] : memref<16x32xf32, #tpu.memory_space<vmem>>, vector<16x32xf32>
    %8 = arith.addf %6, %7 : vector<16x32xf32>
    %cst_7 = arith.constant dense<0.000000e+00> : vector<16xf32>
    %9 = vector.multi_reduction <add>, %8, %cst_7 [1] : vector<16x32xf32> to vector<16xf32>
    %10 = vector.shape_cast %9 : vector<16xf32> to vector<16x1xf32>
    %11 = arith.mulf %8, %8 : vector<16x32xf32>
    %cst_8 = arith.constant dense<0.000000e+00> : vector<16xf32>
    %12 = vector.multi_reduction <add>, %11, %cst_8 [1] : vector<16x32xf32> to vector<16xf32>
    %13 = vector.shape_cast %12 : vector<16xf32> to vector<16x1xf32>
    %cst_9 = arith.constant 3.125000e-02 : f32
    %14 = vector.broadcast %cst_9 : f32 to vector<16x1xf32>
    %15 = arith.mulf %10, %14 : vector<16x1xf32>
    %cst_10 = arith.constant 3.125000e-02 : f32
    %16 = vector.broadcast %cst_10 : f32 to vector<16x1xf32>
    %17 = arith.mulf %13, %16 : vector<16x1xf32>
    %18 = arith.mulf %15, %15 : vector<16x1xf32>
    %19 = arith.subf %17, %18 : vector<16x1xf32>
    %cst_11 = arith.constant 0.000000e+00 : f32
    %20 = vector.broadcast %cst_11 : f32 to vector<16x1xf32>
    %21 = arith.maximumf %19, %20 : vector<16x1xf32>
    %22 = vector.broadcast %15 : vector<16x1xf32> to vector<16x32xf32>
    %23 = arith.subf %8, %22 : vector<16x32xf32>
    %cst_12 = arith.constant 9.99999996E-13 : f32
    %24 = vector.broadcast %cst_12 : f32 to vector<16x1xf32>
    %25 = arith.addf %21, %24 : vector<16x1xf32>
    %26 = math.rsqrt %25 : vector<16x1xf32>
    %27 = vector.broadcast %26 : vector<16x1xf32> to vector<16x32xf32>
    %28 = arith.mulf %23, %27 : vector<16x32xf32>
    %c0_13 = arith.constant 0 : index
    %c0_14 = arith.constant 0 : index
    %29 = vector.load %arg5[%c0_13, %c0_14] : memref<1x32xf32, #tpu.memory_space<vmem>>, vector<1x32xf32>
    %30 = vector.broadcast %29 : vector<1x32xf32> to vector<16x32xf32>
    %31 = arith.mulf %28, %30 : vector<16x32xf32>
    %c0_15 = arith.constant 0 : index
    %c0_16 = arith.constant 0 : index
    %32 = vector.load %arg6[%c0_15, %c0_16] : memref<1x32xf32, #tpu.memory_space<vmem>>, vector<1x32xf32>
    %33 = vector.broadcast %32 : vector<1x32xf32> to vector<16x32xf32>
    %34 = arith.addf %31, %33 : vector<16x32xf32>
    %c0_17 = arith.constant 0 : index
    %c0_18 = arith.constant 0 : index
    %35 = vector.load %arg7[%c0_17, %c0_18] : memref<16x32xf32, #tpu.memory_space<vmem>>, vector<16x32xf32>
    tpu.vector_store %arg7[%c0_17, %c0_18], %34 {strides = array<i32>} : memref<16x32xf32, #tpu.memory_space<vmem>>, vector<16x32xf32>,
    return
  }
  func.func @transform_0(%arg0: i32) -> (i32, i32) {
    %c0_i32 = arith.constant 0 : i32
    %c0_i32_0 = arith.constant 0 : i32
    return %arg0, %c0_i32 : i32, i32
  }
  func.func @transform_1(%arg0: i32) -> (i32, i32) {
    %c0_i32 = arith.constant 0 : i32
    %c0_i32_0 = arith.constant 0 : i32
    return %arg0, %c0_i32 : i32, i32
  }
  func.func @transform_2(%arg0: i32) -> (i32, i32) {
    %c0_i32 = arith.constant 0 : i32
    %c0_i32_0 = arith.constant 0 : i32
    %c0_i32_1 = arith.constant 0 : i32
    return %c0_i32, %c0_i32_0 : i32, i32
  }
  func.func @transform_3(%arg0: i32) -> (i32, i32) {
    %c0_i32 = arith.constant 0 : i32
    %c0_i32_0 = arith.constant 0 : i32
    %c0_i32_1 = arith.constant 0 : i32
    return %c0_i32, %c0_i32_0 : i32, i32
  }
  func.func @transform_4(%arg0: i32) -> (i32, i32) {
    %c0_i32 = arith.constant 0 : i32
    %c0_i32_0 = arith.constant 0 : i32
    %c0_i32_1 = arith.constant 0 : i32
    return %c0_i32, %c0_i32_0 : i32, i32
  }
  func.func @transform_5(%arg0: i32) -> (i32, i32) {
    %c0_i32 = arith.constant 0 : i32
    %c0_i32_0 = arith.constant 0 : i32
    %c0_i32_1 = arith.constant 0 : i32
    return %c0_i32, %c0_i32_0 : i32, i32
  }
  func.func @transform_6(%arg0: i32) -> (i32, i32) {
    %c0_i32 = arith.constant 0 : i32
    %c0_i32_0 = arith.constant 0 : i32
    return %arg0, %c0_i32 : i32, i32
  }
}

</mosaic_0001>

<llo_original>
// kernel: bert_self_output.1
$region0: #{bert_self_output.1}
  #allocation0 [shape = 'u32[]', space=smem, size = 0x4, offset = 0x4, fixed_abs, tag = 'smem constant byte address 0x4 - core index']
  #allocation1 [shape = 'u32[144,128]{1,0:T(1,128)}', space=vmem, size = 0x12000, scoped, tag = 'internal scratch']
  %s0 = inlined_call_operand.hbm [shape: f32[16,32], index: 0, kind: input, shape index: {}]
  %s1 = inlined_call_operand.hbm [shape: f32[16,32], index: 1, kind: input, shape index: {}]
  %s2 = inlined_call_operand.hbm [shape: bf16[32,32], index: 2, kind: input, shape index: {}]
  %s3 = inlined_call_operand.vmem [shape: f32[1,32], index: 3, kind: input, shape index: {}]
  %s4 = inlined_call_operand.vmem [shape: f32[1,32], index: 4, kind: input, shape index: {}]
  %s5 = inlined_call_operand.vmem [shape: f32[1,32], index: 5, kind: input, shape index: {}]
  %s6 = inlined_call_operand.hbm [shape: f32[16,32], index: 6, kind: output, shape index: {}]
  %s7 = sld [smem:[#allocation0]]
  $region46: #{bert_self_output.1} parent=0
    _
  %s9 = ssub.s32 1, %s7
  %s10 = scalar_select 0, %s9, %s7
  $region1: #{bert_self_output.1} parent=0
    #allocation2 [shape = 'u8[8192]{0}', space=vmem, size = 0x2000, scoped, tag = 'input window, operand 0, single buffered']
    #allocation3 [shape = 's32[1]{0}', space=sflag, size = 0x4, scoped, tag = 'scoped memory for bert_self_output.1']
    #allocation4 [shape = 's32[1]{0}', space=sflag, size = 0x4, scoped, tag = 'scoped memory for bert_self_output.1']
    #allocation5 [shape = 'u8[8192]{0}', space=vmem, size = 0x2000, scoped, tag = 'input window, operand 1, single buffered']
    #allocation6 [shape = 's32[1]{0}', space=sflag, size = 0x4, scoped, tag = 'scoped memory for bert_self_output.1']
    #allocation7 [shape = 'u8[8192]{0}', space=vmem, size = 0x2000, scoped, tag = 'input window, operand 2, single buffered']
    #allocation8 [shape = 'u8[8192]{0}', space=vmem, size = 0x2000, scoped, tag = 'output window, operand 0, single buffered']
    %11 = vsyncpa [#allocation3], 0
    %12 = vsyncpa [#allocation6], 0
    %13 = vsyncpa [#allocation4], 0
    // Predicated region
    $region2: #{bert_self_output.1} parent=1 // pred_check
      _
    $region3: #{bert_self_output.1} parent=1 // pred_check_branch
      %15 = sbr.rel (0) target = $region5
    $region4: #{bert_self_output.1} parent=1 // pred_region
      %s17 = ssub.s32 256, 256
      %18 = vsyncadd [#allocation3], %s17
      %s19 = sshll.u32 [#allocation2], 4
      %s20 = int_to_ptr.vmem [resolvable:$true] %s19
      %25 = dma.hbm_to_vmem [thread:$0]  %s0, 256, %s20, [#allocation3], 128, 128, 8
    $region5: #{bert_self_output.1} parent=1 // pred_fallthru
      _
    // Predicated region
    $region6: #{bert_self_output.1} parent=1 // pred_check
      _
    $region7: #{bert_self_output.1} parent=1 // pred_check_branch
      %27 = sbr.rel (0) target = $region9
    $region8: #{bert_self_output.1} parent=1 // pred_region
      %s29 = ssub.s32 256, 256
      %30 = vsyncadd [#allocation6], %s29
      %s31 = sshll.u32 [#allocation5], 4
      %s32 = int_to_ptr.vmem [resolvable:$true] %s31
      %37 = dma.hbm_to_vmem [thread:$0]  %s1, 256, %s32, [#allocation6], 128, 128, 8
    $region9: #{bert_self_output.1} parent=1 // pred_fallthru
      _
    // Predicated region
    $region10: #{bert_self_output.1} parent=1 // pred_check
      _
    $region11: #{bert_self_output.1} parent=1 // pred_check_branch
      %39 = sbr.rel (0) target = $region13
    $region12: #{bert_self_output.1} parent=1 // pred_region
      %s41 = ssub.s32 256, 256
      %42 = vsyncadd [#allocation6], %s41
      %s43 = sshll.u32 [#allocation7], 4
      %s44 = int_to_ptr.vmem [resolvable:$true] %s43
      %49 = dma.hbm_to_vmem [thread:$0]  %s2, 256, %s44, [#allocation6], 64, 64, 4
    $region13: #{bert_self_output.1} parent=1 // pred_fallthru
      _
    // Predicated region
    $region14: #{bert_self_output.1} parent=1 // pred_check
      _
    $region15: #{bert_self_output.1} parent=1 // pred_check_branch
      %51 = sbr.rel (0) target = $region17
    $region16: #{bert_self_output.1} parent=1 // pred_region
      _
    $region17: #{bert_self_output.1} parent=1 // pred_fallthru
      _
    // Predicated region
    $region18: #{bert_self_output.1} parent=1 // pred_check
      _
    $region19: #{bert_self_output.1} parent=1 // pred_check_branch
      %53 = sbr.rel (0) target = $region21
    $region20: #{bert_self_output.1} parent=1 // pred_region
      _
    $region21: #{bert_self_output.1} parent=1 // pred_fallthru
      _
    // Predicated region
    $region22: #{bert_self_output.1} parent=1 // pred_check
      _
    $region23: #{bert_self_output.1} parent=1 // pred_check_branch
      %55 = sbr.rel (0) target = $region25
    $region24: #{bert_self_output.1} parent=1 // pred_region
      _
    $region25: #{bert_self_output.1} parent=1 // pred_fallthru
      _
    // Predicated region
    $region26: #{bert_self_output.1} parent=1 // pred_check
      _
    $region27: #{bert_self_output.1} parent=1 // pred_check_branch
      %57 = sbr.rel (0) target = $region29
    $region28: #{bert_self_output.1} parent=1 // pred_region
      %58 = dma.done [#allocation3], 256
    $region29: #{bert_self_output.1} parent=1 // pred_fallthru
      _
    // Predicated region
    $region30: #{bert_self_output.1} parent=1 // pred_check
      _
    $region31: #{bert_self_output.1} parent=1 // pred_check_branch
      %60 = sbr.rel (0) target = $region33
    $region32: #{bert_self_output.1} parent=1 // pred_region
      %61 = dma.done [#allocation6], 256
    $region33: #{bert_self_output.1} parent=1 // pred_fallthru
      _
    // Predicated region
    $region34: #{bert_self_output.1} parent=1 // pred_check
      _
    $region35: #{bert_self_output.1} parent=1 // pred_check_branch
      %63 = sbr.rel (0) target = $region37
    $region36: #{bert_self_output.1} parent=1 // pred_region
      %64 = dma.done [#allocation6], 256
    $region37: #{bert_self_output.1} parent=1 // pred_fallthru
      _
    %v66 = vld [vmem:[#allocation2] sm:$0xff]
    %v67 = vld [vmem:[#allocation2 + $0x8] sm:$0xff]
    %v68 = vpack.c.bf16 %v67, %v66
    %v69 = vld [vmem:[#allocation7] sm:$0xf]
    %v70 = vld [vmem:[#allocation7 + $0x4] sm:$0xf]
    %v71 = vld [vmem:[#allocation7 + $0x8] sm:$0xf]
    %v72 = vld [vmem:[#allocation7 + $0xc] sm:$0xf]
    %v73 = vld [vmem:[%s3] sm:$0x1]
    %v75 = vlaneseq
    %v76 = vshrl.u32 %v75, 7
    %v77 = vsub.s32 0, %v76
    %v78 = vrot.slane %v73, %v77
    %v84 = vunpack.c.l.b16 %v69
    %v85 = vunpack.c.l.b16 %v70
    %v86 = vunpack.c.l.b16 %v71
    %v87 = vunpack.c.l.b16 %v72
    %v88 = vpack.c.b16 %v85, %v84
    %v89 = vpack.c.b16 %v87, %v86
    %vm92 = vcmask 261120
    %v94 = vsel %vm92, %v68, 0
    %96 = vmatprep.subr.bf16.mxu0 0
    %97 = vmatpush1.bf16.msra.mxu0 0
    %98 = vmatprep.subr.bf16.mxu0 0
    %99 = vmatpush1.bf16.msra.mxu0 0
    %100 = vmatprep.subr.bf16.mxu0 0
    %101 = vmatpush1.bf16.msra.mxu0 0
    %102 = vmatprep.subr.bf16.mxu0 0
    %103 = vmatpush1.bf16.msra.mxu0 0
    %104 = vmatprep.subr.bf16.mxu0 0
    %105 = vmatpush1.bf16.msra.mxu0 0
    %106 = vmatprep.subr.bf16.mxu0 0
    %107 = vmatpush1.bf16.msra.mxu0 0
    %108 = vmatprep.subr.bf16.mxu0 0
    %109 = vmatpush1.bf16.msra.mxu0 %v89
    %110 = vmatprep.subr.bf16.mxu0 0
    %111 = vmatpush1.bf16.msra.mxu0 %v88
    %112 = vmatprep.subr.bf16.mxu0 0
    %113 = vmatpush2.bf16.msra.mxu0 0
    %114 = vmatprep.subr.bf16.mxu0 0
    %115 = vmatpush2.bf16.msra.mxu0 0
    %116 = vmatprep.subr.bf16.mxu0 0
    %117 = vmatpush2.bf16.msra.mxu0 0
    %118 = vmatprep.subr.bf16.mxu0 0
    %119 = vmatpush2.bf16.msra.mxu0 0
    %120 = vmatprep.subr.bf16.mxu0 0
    %121 = vmatpush2.bf16.msra.mxu0 0
    %122 = vmatprep.subr.bf16.mxu0 0
    %123 = vmatpush2.bf16.msra.mxu0 0
    %124 = vmatprep.subr.bf16.mxu0 0
    %125 = vmatpush2.bf16.msra.mxu0 0
    %126 = vmatprep.subr.bf16.mxu0 0
    %127 = vmatpush2.bf16.msra.mxu0 0
    %128 = vmatprep.mubr.bf16.mxu0 0
    %129 = vmatmul.mubr.bf16.gmra.mxu0 %v94
    %v130 = vpop.f32.mrf.mxu0
    %v131 = vadd.f32 %v78, %v130
    %v132 = vpop.f32.mrf.mxu0
    %v133 = vpop.f32.mrf.mxu0
    %v134 = vadd.f32 %v78, %v133
    %v135 = vpop.f32.mrf.mxu0
    %136 = vdwg.mxu0
    %v137 = vld [vmem:[#allocation5] sm:$0xff]
    %v138 = vld [vmem:[#allocation5 + $0x8] sm:$0xff]
    %v139 = vadd.f32 %v131, %v137
    %v140 = vadd.f32 %v134, %v138
    %v141 = vsel %vm92, %v139, 0.0
    %142 = vadd.xlane.f32.xlu0 %v141
    %v143 = vpop.xlane.xlu0 %142
    %v144 = vsel %vm92, %v140, 0.0
    %145 = vadd.xlane.f32.xlu0 %v144
    %v146 = vpop.xlane.xlu0 %145
    %v147 = vmul.f32 %v139, %v139
    %v148 = vmul.f32 %v140, %v140
    %v149 = vsel %vm92, %v147, 0.0
    %150 = vadd.xlane.f32.xlu0 %v149
    %v151 = vpop.xlane.xlu0 %150
    %v152 = vsel %vm92, %v148, 0.0
    %153 = vadd.xlane.f32.xlu0 %v152
    %v154 = vpop.xlane.xlu0 %153
    %v155 = vmul.f32 %v143, 0.03125
    %v156 = vmul.f32 %v146, 0.03125
    %v157 = vmul.f32 %v151, 0.03125
    %v158 = vmul.f32 %v154, 0.03125
    %v159 = vmul.f32 %v155, %v155
    %v160 = vmul.f32 %v156, %v156
    %v161 = vsub.f32 %v157, %v159
    %v162 = vsub.f32 %v158, %v160
    %v163 = vmax.f32 %v161, 0.0
    %v164 = vmax.f32 %v162, 0.0
    %v165 = vsub.f32 %v139, %v155
    %v166 = vsub.f32 %v140, %v156
    %v167 = vadd.f32 %v163, 1e-12
    %v168 = vadd.f32 %v164, 1e-12
    %v169 = vrsqrt.pop %v167
    %v170 = vrsqrt.pop %v168
    %v171 = vmul.f32 %v165, %v169
    %v172 = vmul.f32 %v166, %v170
    %v173 = vld [vmem:[%s4] sm:$0x1]
    %v175 = vlaneseq
    %v176 = vshrl.u32 %v175, 7
    %v177 = vsub.s32 0, %v176
    %v178 = vrot.slane %v173, %v177
    %v180 = vmul.f32 %v171, %v178
    %v181 = vmul.f32 %v172, %v178
    %v182 = vld [vmem:[%s5] sm:$0x1]
    %v184 = vlaneseq
    %v185 = vshrl.u32 %v184, 7
    %v186 = vsub.s32 0, %v185
    %v187 = vrot.slane %v182, %v186
    %v189 = vadd.f32 %v180, %v187
    %v190 = vadd.f32 %v181, %v187
    %191 = vst.msk [vmem:[#allocation8] sm:$0xff] %vm92, %v189
    %192 = vst.msk [vmem:[#allocation8 + $0x8] sm:$0xff] %vm92, %v190
    // Predicated region
    $region38: #{bert_self_output.1} parent=1 // pred_check
      _
    $region39: #{bert_self_output.1} parent=1 // pred_check_branch
      %194 = sbr.rel (0) target = $region41
    $region40: #{bert_self_output.1} parent=1 // pred_region
      %s196 = ssub.s32 256, 256
      %197 = vsyncadd [#allocation4], %s196
      %s198 = sshll.u32 [#allocation8], 4
      %s199 = int_to_ptr.vmem [resolvable:$true] %s198
      %204 = dma.vmem_to_hbm [thread:$0]  %s199, 256, %s6, [#allocation4], 128, 128, 8
    $region41: #{bert_self_output.1} parent=1 // pred_fallthru
      _
    // Predicated region
    $region42: #{bert_self_output.1} parent=1 // pred_check
      _
    $region43: #{bert_self_output.1} parent=1 // pred_check_branch
      %206 = sbr.rel (0) target = $region45
    $region44: #{bert_self_output.1} parent=1 // pred_region
      %207 = dma.done [#allocation4], 256
    $region45: #{bert_self_output.1} parent=1 // pred_fallthru
      _
    %208 = vsyncpa [#allocation3], 1
    %209 = vsyncpa [#allocation6], 1
    %210 = vsyncpa [#allocation4], 1

</llo_original>
